<compile_context>
chip_gen: v5e
topology: v5e:2x2
jax: 0.10.0
libtpu: 0.0.40
codegen_flags: <defaults>
</compile_context>

<pallas_src>
import functools

import jax
import jax.numpy as jnp
from jax.experimental import pallas as pl
from jax.experimental.pallas import tpu as pltpu


# ---------------------------------------------------------------------------
# Kernel: one fused row tile of   out = relu(x @ W1 + b1) @ W2 + b2
# ---------------------------------------------------------------------------
def edge_model_kernel(x_ref, w1_ref, b1_ref, w2_ref, b2_ref, o_ref):
    # x_ref : (TM, P*F)   streaming, lane-dense packed edge features
    # w1_ref: (P*F, P*H)  block-diagonal W1 (resident: constant index map)
    # b1_ref: (1,  P*H)   f32 bias
    # w2_ref: (P*H, P*H)  block-diagonal W2 (resident)
    # b2_ref: (1,  P*H)   f32 bias
    # o_ref : (TM, P*H)
    # Default MXU precision passed the 1e-4 check; use precision=HIGHEST here
    # if closer f32 fidelity is ever required (kernel is HBM-bound, so it is
    # nearly free).
    h = jnp.dot(x_ref[...], w1_ref[...], preferred_element_type=jnp.float32)
    h = jnp.maximum(h + b1_ref[...], 0.0)                 # bias + ReLU in f32
    out = jnp.dot(h.astype(w2_ref.dtype), w2_ref[...],
                  preferred_element_type=jnp.float32)
    o_ref[...] = (out + b2_ref[...]).astype(o_ref.dtype)


def _round_up(x, m):
    return ((x + m - 1) // m) * m


def _pack_factor(f, h, lane=128):
    """Smallest P with P*f and P*h both lane (128) multiples; 1 if none <= lane."""
    p = 1
    while ((p * f) % lane or (p * h) % lane) and p < lane:
        p += 1
    if (p * f) % lane or (p * h) % lane:
        return 1
    return p


def pack_params(w1, b1, w2, b2, *, compute_dtype=None, lane=128):
    """Build block-diagonal packed weights ONCE (hoist out of the hot path).

    Weights are stored pre-transposed: w1 [2*in_dim, hid], w2 [hid, hid].
    compute_dtype=jnp.bfloat16 enables bf16 streaming (accuracy tradeoff).
    Returns (P, (w1_bd, b1_t, w2_bd, b2_t)).
    """
    f, h = w1.shape
    p = _pack_factor(f, h, lane)
    dt = w1.dtype if compute_dtype is None else compute_dtype
    eye = jnp.eye(p, dtype=dt)
    w1_bd = jnp.kron(eye, w1.astype(dt))                  # (P*F, P*H)
    w2_bd = jnp.kron(eye, w2.astype(dt))                  # (P*H, P*H)
    b1_t = jnp.tile(jnp.asarray(b1, jnp.float32).reshape(1, h), (1, p))
    b2_t = jnp.tile(jnp.asarray(b2, jnp.float32).reshape(1, h), (1, p))
    return p, (w1_bd, b1_t, w2_bd, b2_t)


@functools.partial(jax.jit, static_argnames=("pack", "hid", "tile_m_max"))
def edge_model_packed(x, w1_bd, b1_t, w2_bd, b2_t, *, pack, hid,
                      tile_m_max=2048):
    """Fused EdgeModel forward on pre-packed params. x: (E, 2*in_dim) -> (E, hid)."""
    E, F = x.shape
    P = pack
    PF, PH = P * F, P * hid
    assert w1_bd.shape == (PF, PH) and w2_bd.shape == (PH, PH)

    out_dtype = x.dtype

    # Pad only the tiny (< P rows) tail so E is a multiple of the pack factor;
    # skipped entirely when already aligned (no extra HBM round trip of x).
    rem = E % P
    if rem:
        x = jnp.pad(x, ((0, P - rem), (0, 0)))
    R = x.shape[0] // P
    x_p = x.reshape(R, PF)                                # layout-preserving

    if x_p.dtype != w1_bd.dtype:
        x_p = x_p.astype(w1_bd.dtype)                     # optional bf16 path

    # Adaptive row tiling:
    #  * large tiles (<= tile_m_max) to amortize the ~0.35 us per-step cost,
    #  * at least 4 grid steps when R allows (v7x megacore: 2 TensorCores),
    #  * balanced block count so ragged-tile waste is < 8 rows per call.
    n_blocks = max(pl.cdiv(R, tile_m_max), min(4, pl.cdiv(R, 8)))
    tile_m = max(8, _round_up(pl.cdiv(R, n_blocks), 8))
    grid = (pl.cdiv(R, tile_m),)       # ragged last tile handled by Pallas

    out = pl.pallas_call(
        edge_model_kernel,
        out_shape=jax.ShapeDtypeStruct((R, PH), out_dtype),
        grid_spec=pltpu.PrefetchScalarGridSpec(
            num_scalar_prefetch=0,
            grid=grid,
            in_specs=[
                # streaming x tiles (default double-buffered pipeline)
                pl.BlockSpec((tile_m, PF), lambda i: (i, 0)),
                pl.BlockSpec((PF, PH), lambda i: (0, 0)),   # W1 (resident)
                pl.BlockSpec((1, PH), lambda i: (0, 0)),    # b1
                pl.BlockSpec((PH, PH), lambda i: (0, 0)),   # W2 (resident)
                pl.BlockSpec((1, PH), lambda i: (0, 0)),    # b2
            ],
            out_specs=pl.BlockSpec((tile_m, PH), lambda i: (i, 0)),
        ),
        compiler_params=pltpu.CompilerParams(
            dimension_semantics=("parallel",),   # shards grid across v7x TCs
        ),
    )(x_p, w1_bd, b1_t, w2_bd, b2_t)

    out = out.reshape(R * P, hid)
    # Pad rows compute relu(b1)@W2+b2 junk and are sliced off here; do NOT
    # alias / accumulate into this output buffer without masking them.
    return out if R * P == E else out[:E]


def edge_model(x, w1, b1, w2, b2, *, tile_m_max=2048, compute_dtype=None):
    """One-shot convenience wrapper (packs weights per call). Prefer
    pack_params() + edge_model_packed() when weights are reused."""
    p, packed = pack_params(w1, b1, w2, b2, compute_dtype=compute_dtype)
    return edge_model_packed(x, *packed, pack=p, hid=w2.shape[1],
                             tile_m_max=tile_m_max)


def init_params(key, in_dim, hid, dtype=jnp.float32):
    # Deterministic init mimicking nn.Linear's U(-1/sqrt(fan_in), 1/sqrt(fan_in)).
    f_in1 = in_dim * 2
    k1, k2, k3, k4 = jax.random.split(key, 4)
    lim1 = 1.0 / jnp.sqrt(jnp.asarray(f_in1, dtype))
    lim2 = 1.0 / jnp.sqrt(jnp.asarray(hid, dtype))
    # stored transposed: [in_features, out_features]
    w1 = jax.random.uniform(k1, (f_in1, hid), dtype, -lim1, lim1)
    b1 = jax.random.uniform(k2, (1, hid), dtype, -lim1, lim1)
    w2 = jax.random.uniform(k3, (hid, hid), dtype, -lim2, lim2)
    b2 = jax.random.uniform(k4, (1, hid), dtype, -lim2, lim2)
    return w1, b1, w2, b2


def edge_model_ref(x, w1, b1, w2, b2):
    h = jnp.maximum(x @ w1 + b1, 0.0)
    return h @ w2 + b2


if __name__ == "__main__":
    in_dim = 16        # node feature dim; edge input = 2 * in_dim = 32
    hid = 32
    num_edges = 999    # deliberately NOT a multiple of pack/tile sizes

    key = jax.random.PRNGKey(0)
    kx, kp = jax.random.split(key)
    x = jax.random.normal(kx, (num_edges, in_dim * 2), jnp.float32)
    w1, b1, w2, b2 = init_params(kp, in_dim, hid)

    # Pack the block-diagonal weights once; reuse across calls.
    P, packed = pack_params(w1, b1, w2, b2)

    out = edge_model_packed(x, *packed, pack=P, hid=hid)
    out = jax.block_until_ready(out)

    ref = edge_model_ref(x, w1, b1, w2, b2)
    assert out.shape == (num_edges, hid)
    assert jnp.allclose(out, ref, atol=1e-4, rtol=1e-4), "mismatch vs reference"

    print("KERNEL_OK")
</pallas_src>

<mosaic_0001>
module attributes {stable_mosaic.version = 11 : i64} {
  func.func @edge_model_kernel(%arg0: i32, %arg1: memref<64x128xf32, #tpu.memory_space<vmem>>, %arg2: memref<128x128xf32, #tpu.memory_space<vmem>>, %arg3: memref<1x128xf32, #tpu.memory_space<vmem>>, %arg4: memref<128x128xf32, #tpu.memory_space<vmem>>, %arg5: memref<1x128xf32, #tpu.memory_space<vmem>>, %arg6: memref<64x128xf32, #tpu.memory_space<vmem>>) attributes {dimension_semantics = [#tpu.dimension_semantics<parallel>], iteration_bounds = array<i64: 4>, scalar_prefetch = 0 : i64, scratch_operands = 0 : i64, tpu.core_type = #tpu.core_type<tc>, window_params = [{transform_indices = @transform_0, window_bounds = array<i64: 64, 128>}, {pipeline_mode = #tpu.pipeline_mode<synchronous>, transform_indices = @transform_1, window_bounds = array<i64: 128, 128>}, {pipeline_mode = #tpu.pipeline_mode<synchronous>, transform_indices = @transform_2, window_bounds = array<i64: 1, 128>}, {pipeline_mode = #tpu.pipeline_mode<synchronous>, transform_indices = @transform_3, window_bounds = array<i64: 128, 128>}, {pipeline_mode = #tpu.pipeline_mode<synchronous>, transform_indices = @transform_4, window_bounds = array<i64: 1, 128>}, {transform_indices = @transform_5, window_bounds = array<i64: 64, 128>}]} {
    %c0 = arith.constant 0 : index
    %c0_0 = arith.constant 0 : index
    %0 = vector.load %arg1[%c0, %c0_0] : memref<64x128xf32, #tpu.memory_space<vmem>>, vector<64x128xf32>
    %c0_1 = arith.constant 0 : index
    %c0_2 = arith.constant 0 : index
    %1 = vector.load %arg2[%c0_1, %c0_2] : memref<128x128xf32, #tpu.memory_space<vmem>>, vector<128x128xf32>
    %cst = arith.constant dense<0.000000e+00> : vector<64x128xf32>
    %2 = tpu.matmul %0, %1, %cst {dimension_numbers = #tpu.dot_dimension_numbers<[1], [0], [0], [1], [0, 0, 1, 1], [], []>} : vector<64x128xf32>, vector<128x128xf32>, vector<64x128xf32> -> vector<64x128xf32>
    %c0_3 = arith.constant 0 : index
    %c0_4 = arith.constant 0 : index
    %3 = vector.load %arg3[%c0_3, %c0_4] : memref<1x128xf32, #tpu.memory_space<vmem>>, vector<1x128xf32>
    %4 = vector.broadcast %3 : vector<1x128xf32> to vector<64x128xf32>
    %5 = arith.addf %2, %4 : vector<64x128xf32>
    %cst_5 = arith.constant 0.000000e+00 : f32
    %6 = vector.broadcast %cst_5 : f32 to vector<64x128xf32>
    %7 = arith.maximumf %5, %6 : vector<64x128xf32>
    %c0_6 = arith.constant 0 : index
    %c0_7 = arith.constant 0 : index
    %8 = vector.load %arg4[%c0_6, %c0_7] : memref<128x128xf32, #tpu.memory_space<vmem>>, vector<128x128xf32>
    %cst_8 = arith.constant dense<0.000000e+00> : vector<64x128xf32>
    %9 = tpu.matmul %7, %8, %cst_8 {dimension_numbers = #tpu.dot_dimension_numbers<[1], [0], [0], [1], [0, 0, 1, 1], [], []>} : vector<64x128xf32>, vector<128x128xf32>, vector<64x128xf32> -> vector<64x128xf32>
    %c0_9 = arith.constant 0 : index
    %c0_10 = arith.constant 0 : index
    %10 = vector.load %arg5[%c0_9, %c0_10] : memref<1x128xf32, #tpu.memory_space<vmem>>, vector<1x128xf32>
    %11 = vector.broadcast %10 : vector<1x128xf32> to vector<64x128xf32>
    %12 = arith.addf %9, %11 : vector<64x128xf32>
    %c0_11 = arith.constant 0 : index
    %c0_12 = arith.constant 0 : index
    %13 = vector.load %arg6[%c0_11, %c0_12] : memref<64x128xf32, #tpu.memory_space<vmem>>, vector<64x128xf32>
    tpu.vector_store %arg6[%c0_11, %c0_12], %12 {strides = array<i32>} : memref<64x128xf32, #tpu.memory_space<vmem>>, vector<64x128xf32>,
    return
  }
  func.func @transform_0(%arg0: i32) -> (i32, i32) {
    %c0_i32 = arith.constant 0 : i32
    %c0_i32_0 = arith.constant 0 : i32
    return %arg0, %c0_i32 : i32, i32
  }
  func.func @transform_1(%arg0: i32) -> (i32, i32) {
    %c0_i32 = arith.constant 0 : i32
    %c0_i32_0 = arith.constant 0 : i32
    %c0_i32_1 = arith.constant 0 : i32
    return %c0_i32, %c0_i32_0 : i32, i32
  }
  func.func @transform_2(%arg0: i32) -> (i32, i32) {
    %c0_i32 = arith.constant 0 : i32
    %c0_i32_0 = arith.constant 0 : i32
    %c0_i32_1 = arith.constant 0 : i32
    return %c0_i32, %c0_i32_0 : i32, i32
  }
  func.func @transform_3(%arg0: i32) -> (i32, i32) {
    %c0_i32 = arith.constant 0 : i32
    %c0_i32_0 = arith.constant 0 : i32
    %c0_i32_1 = arith.constant 0 : i32
    return %c0_i32, %c0_i32_0 : i32, i32
  }
  func.func @transform_4(%arg0: i32) -> (i32, i32) {
    %c0_i32 = arith.constant 0 : i32
    %c0_i32_0 = arith.constant 0 : i32
    %c0_i32_1 = arith.constant 0 : i32
    return %c0_i32, %c0_i32_0 : i32, i32
  }
  func.func @transform_5(%arg0: i32) -> (i32, i32) {
    %c0_i32 = arith.constant 0 : i32
    %c0_i32_0 = arith.constant 0 : i32
    return %arg0, %c0_i32 : i32, i32
  }
}

</mosaic_0001>

<llo_original>
// kernel: edge_model_packed.1
$region0: #{edge_model_packed.1}
  #allocation0 [shape = 'u32[]', space=smem, size = 0x4, offset = 0x4, fixed_abs, tag = 'smem constant byte address 0x4 - core index']
  #allocation1 [shape = 'u32[72,128]{1,0:T(1,128)}', space=vmem, size = 0x9000, scoped, tag = 'internal scratch']
  %s0 = inlined_call_operand.vmem [shape: f32[250,128], index: 0, kind: input, shape index: {}]
  %s1 = inlined_call_operand.vmem [shape: f32[128,128], index: 1, kind: input, shape index: {}]
  %s2 = inlined_call_operand.vmem [shape: f32[1,128], index: 2, kind: input, shape index: {}]
  %s3 = inlined_call_operand.vmem [shape: f32[128,128], index: 3, kind: input, shape index: {}]
  %s4 = inlined_call_operand.vmem [shape: f32[1,128], index: 4, kind: input, shape index: {}]
  %s5 = inlined_call_operand.vmem [shape: f32[250,128], index: 5, kind: output, shape index: {}]
  %s6 = sld [smem:[#allocation0]]
  $region53: #{edge_model_packed.1} parent=0
    _
  %s8 = ssub.s32 1, %s6
  %s9 = scalar_select 0, %s8, %s6
  loop: start=0, step=1, limit=6
  $region2: #{edge_model_packed.1} parent=0 // loop_pre_header
    _
  $region3: #{edge_model_packed.1} parent=0 // loop_header
    %s11 = sphi 0, %s15
    %p12 = scmp.ge.s32.totalorder %s11, 6
    %s21 = sphi 0, %s23
    %s24 = sphi 0, %s21
    %s25 = sphi 0, %s24
    %s41 = sphi 0, %s25
    %s45 = sphi 0, %s45
    %s47 = sphi 0, %s45
    %s48 = sphi 0, %s47
    %s62 = sphi 0, %s48
    %s66 = sphi 0, %s66
    %s68 = sphi 0, %s66
    %s69 = sphi 0, %s68
    %s83 = sphi 0, %s69
    %s87 = sphi 0, %s87
    %s89 = sphi 0, %s87
    %s90 = sphi 0, %s89
    %s104 = sphi 0, %s90
    %s108 = sphi 0, %s108
    %s110 = sphi 0, %s108
    %s111 = sphi 0, %s110
    %s125 = sphi 0, %s111
    %s131 = sphi 0, %s133
    %s134 = sphi 0, %s131
    %s135 = sphi 0, %s134
    %s151 = sphi 0, %s135
  $region4: #{edge_model_packed.1} parent=0 // loop_header_branch
    %14 = sbr.rel (%p12) target = $region8
  $region5: #{edge_model_packed.1} parent=0 // loop_body
    %s16 = ssub.s32 %s11, 1
    %s17 = ssub.s32 %s11, 2
    %s18 = sadd.s32 %s11, 1
    %s19 = ssub.s32 %s11, %s18
    %p20 = scmp.eq.s32.totalorder %s19, 0
    %s22 = sadd.s32 %s21, 1
    %s23 = scalar_select %p20, %s21, %s22
    %p26 = pneg %p20
    %p27 = scmp.eq.s32.totalorder %s11, 3
    %p28 = por %p26, %p27
    %p29 = scmp.ne.s32.totalorder %s21, %s24
    %p30 = scmp.eq.s32.totalorder %s11, 0
    %p31 = por %p29, %p30
    %p32 = scmp.ne.s32.totalorder %s21, %s24
    %p33 = scmp.eq.s32.totalorder %s16, 3
    %p34 = por %p32, %p33
    %p35 = scmp.ne.s32.totalorder %s24, %s25
    %p36 = scmp.eq.s32.totalorder %s16, 0
    %p37 = por %p35, %p36
    %p38 = scmp.ne.s32.totalorder %s24, %s25
    %p39 = scmp.eq.s32.totalorder %s17, 3
    %p40 = por %p38, %p39
    %p42 = scmp.ne.s32.totalorder %s25, %s41
    %p43 = scmp.eq.s32.totalorder %s17, 0
    %p44 = por %p42, %p43
    %s46 = sadd.s32 %s45, 1
    %p49 = scmp.eq.s32.totalorder %s11, 3
    %p50 = scmp.ne.s32.totalorder %s45, %s47
    %p51 = scmp.eq.s32.totalorder %s11, 0
    %p52 = por %p50, %p51
    %p53 = scmp.ne.s32.totalorder %s45, %s47
    %p54 = scmp.eq.s32.totalorder %s16, 3
    %p55 = por %p53, %p54
    %p56 = scmp.ne.s32.totalorder %s47, %s48
    %p57 = scmp.eq.s32.totalorder %s16, 0
    %p58 = por %p56, %p57
    %p59 = scmp.ne.s32.totalorder %s47, %s48
    %p60 = scmp.eq.s32.totalorder %s17, 3
    %p61 = por %p59, %p60
    %p63 = scmp.ne.s32.totalorder %s48, %s62
    %p64 = scmp.eq.s32.totalorder %s17, 0
    %p65 = por %p63, %p64
    %s67 = sadd.s32 %s66, 1
    %p70 = scmp.eq.s32.totalorder %s11, 3
    %p71 = scmp.ne.s32.totalorder %s66, %s68
    %p72 = scmp.eq.s32.totalorder %s11, 0
    %p73 = por %p71, %p72
    %p74 = scmp.ne.s32.totalorder %s66, %s68
    %p75 = scmp.eq.s32.totalorder %s16, 3
    %p76 = por %p74, %p75
    %p77 = scmp.ne.s32.totalorder %s68, %s69
    %p78 = scmp.eq.s32.totalorder %s16, 0
    %p79 = por %p77, %p78
    %p80 = scmp.ne.s32.totalorder %s68, %s69
    %p81 = scmp.eq.s32.totalorder %s17, 3
    %p82 = por %p80, %p81
    %p84 = scmp.ne.s32.totalorder %s69, %s83
    %p85 = scmp.eq.s32.totalorder %s17, 0
    %p86 = por %p84, %p85
    %s88 = sadd.s32 %s87, 1
    %p91 = scmp.eq.s32.totalorder %s11, 3
    %p92 = scmp.ne.s32.totalorder %s87, %s89
    %p93 = scmp.eq.s32.totalorder %s11, 0
    %p94 = por %p92, %p93
    %p95 = scmp.ne.s32.totalorder %s87, %s89
    %p96 = scmp.eq.s32.totalorder %s16, 3
    %p97 = por %p95, %p96
    %p98 = scmp.ne.s32.totalorder %s89, %s90
    %p99 = scmp.eq.s32.totalorder %s16, 0
    %p100 = por %p98, %p99
    %p101 = scmp.ne.s32.totalorder %s89, %s90
    %p102 = scmp.eq.s32.totalorder %s17, 3
    %p103 = por %p101, %p102
    %p105 = scmp.ne.s32.totalorder %s90, %s104
    %p106 = scmp.eq.s32.totalorder %s17, 0
    %p107 = por %p105, %p106
    %s109 = sadd.s32 %s108, 1
    %p112 = scmp.eq.s32.totalorder %s11, 3
    %p113 = scmp.ne.s32.totalorder %s108, %s110
    %p114 = scmp.eq.s32.totalorder %s11, 0
    %p115 = por %p113, %p114
    %p116 = scmp.ne.s32.totalorder %s108, %s110
    %p117 = scmp.eq.s32.totalorder %s16, 3
    %p118 = por %p116, %p117
    %p119 = scmp.ne.s32.totalorder %s110, %s111
    %p120 = scmp.eq.s32.totalorder %s16, 0
    %p121 = por %p119, %p120
    %p122 = scmp.ne.s32.totalorder %s110, %s111
    %p123 = scmp.eq.s32.totalorder %s17, 3
    %p124 = por %p122, %p123
    %p126 = scmp.ne.s32.totalorder %s111, %s125
    %p127 = scmp.eq.s32.totalorder %s17, 0
    %p128 = por %p126, %p127
    %s129 = ssub.s32 %s11, %s18
    %p130 = scmp.eq.s32.totalorder %s129, 0
    %s132 = sadd.s32 %s131, 1
    %s133 = scalar_select %p130, %s131, %s132
    %p136 = pneg %p130
    %p137 = scmp.eq.s32.totalorder %s11, 3
    %p138 = por %p136, %p137
    %p139 = scmp.ne.s32.totalorder %s131, %s134
    %p140 = scmp.eq.s32.totalorder %s11, 0
    %p141 = por %p139, %p140
    %p142 = scmp.ne.s32.totalorder %s131, %s134
    %p143 = scmp.eq.s32.totalorder %s16, 3
    %p144 = por %p142, %p143
    %p145 = scmp.ne.s32.totalorder %s134, %s135
    %p146 = scmp.eq.s32.totalorder %s16, 0
    %p147 = por %p145, %p146
    %p148 = scmp.ne.s32.totalorder %s134, %s135
    %p149 = scmp.eq.s32.totalorder %s17, 3
    %p150 = por %p148, %p149
    %p152 = scmp.ne.s32.totalorder %s135, %s151
    %p153 = scmp.eq.s32.totalorder %s17, 0
    %p154 = por %p152, %p153
    %p155 = scmp.le.s32.totalorder 1, %s11
    %p156 = scmp.lt.s32.totalorder %s11, 5
    %p157 = pnand %p155, %p156
    %p158 = pneg %p157
    // Predicated region
    $region9: #{edge_model_packed.1} parent=5 // pred_check
      _
    $region10: #{edge_model_packed.1} parent=5 // pred_check_branch
      %160 = sbr.rel (%p157) target = $region12
    $region11: #{edge_model_packed.1} parent=5 // pred_region
      %s161 = ssub.s32 %s11, 1
      // Predicated region
      $region13: #{edge_model_packed.1} parent=11 // pred_check
        %p162 = pneg %p58
      $region14: #{edge_model_packed.1} parent=11 // pred_check_branch
        %164 = sbr.rel (%p162) target = $region16
      $region15: #{edge_model_packed.1} parent=11 // pred_region
        _
      $region16: #{edge_model_packed.1} parent=11 // pred_fallthru
        _
      // Predicated region
      $region17: #{edge_model_packed.1} parent=11 // pred_check
        %p165 = pneg %p79
      $region18: #{edge_model_packed.1} parent=11 // pred_check_branch
        %167 = sbr.rel (%p165) target = $region20
      $region19: #{edge_model_packed.1} parent=11 // pred_region
        _
      $region20: #{edge_model_packed.1} parent=11 // pred_fallthru
        _
      // Predicated region
      $region21: #{edge_model_packed.1} parent=11 // pred_check
        %p168 = pneg %p100
      $region22: #{edge_model_packed.1} parent=11 // pred_check_branch
        %170 = sbr.rel (%p168) target = $region24
      $region23: #{edge_model_packed.1} parent=11 // pred_region
        _
      $region24: #{edge_model_packed.1} parent=11 // pred_fallthru
        _
      // Predicated region
      $region25: #{edge_model_packed.1} parent=11 // pred_check
        %p171 = pneg %p121
      $region26: #{edge_model_packed.1} parent=11 // pred_check_branch
        %173 = sbr.rel (%p171) target = $region28
      $region27: #{edge_model_packed.1} parent=11 // pred_region
        _
      $region28: #{edge_model_packed.1} parent=11 // pred_fallthru
        _
    $region12: #{edge_model_packed.1} parent=5 // pred_fallthru
      _
    %p174 = scmp.lt.s32.totalorder %s11, 4
    // Predicated region
    $region29: #{edge_model_packed.1} parent=5 // pred_check
      %p175 = pneg %p174
    $region30: #{edge_model_packed.1} parent=5 // pred_check_branch
      %177 = sbr.rel (%p175) target = $region32
    $region31: #{edge_model_packed.1} parent=5 // pred_region
      // Predicated region
      $region33: #{edge_model_packed.1} parent=31 // pred_check
        %p178 = pneg %p31
      $region34: #{edge_model_packed.1} parent=31 // pred_check_branch
        %180 = sbr.rel (%p178) target = $region36
      $region35: #{edge_model_packed.1} parent=31 // pred_region
        %s181 = smul.u32 8, %s11
        %p182 = scmp.lt.s32.totalorder %s181, 31
        %s183 = scalar_select %p182, %s181, 31
        %s184 = smul.addr %s183, 8
        %s185 = scalar_lea.vmem %s0, %s184
        %s186 = smul.u32 8, %s11
      $region36: #{edge_model_packed.1} parent=31 // pred_fallthru
        _
    $region32: #{edge_model_packed.1} parent=5 // pred_fallthru
      _
    %p187 = scmp.le.s32.totalorder 1, %s11
    %p188 = scmp.lt.s32.totalorder %s11, 5
    %p189 = pnand %p187, %p188
    %p190 = pneg %p189
    // Predicated region
    $region37: #{edge_model_packed.1} parent=5 // pred_check
      _
    $region38: #{edge_model_packed.1} parent=5 // pred_check_branch
      %192 = sbr.rel (%p189) target = $region40
    $region39: #{edge_model_packed.1} parent=5 // pred_region
      %s193 = ssub.s32 %s11, 1
      %s194 = smul.u32 8, %s16
      %p195 = scmp.lt.s32.totalorder %s194, 31
      %s196 = scalar_select %p195, %s194, 31
      %s197 = smul.addr %s196, 8
      %s198 = scalar_lea.vmem %s0, %s197
      %p199 = pneg %p37
      %p200 = pneg %p34
      %p201 = pneg %p58
      %p202 = pneg %p55
      %p203 = pneg %p79
      %p204 = pneg %p76
      %p205 = pneg %p100
      %p206 = pneg %p97
      %p207 = pneg %p121
      %p208 = pneg %p118
      %p209 = pneg %p147
      %p210 = pneg %p144
      %s211 = smul.u32 8, %s16
      %p212 = scmp.lt.s32.totalorder %s211, 31
      %s213 = scalar_select %p212, %s211, 31
      %s214 = smul.addr %s213, 8
      %s215 = scalar_lea.vmem %s5, %s214
      %s216 = smul.u32 8, %s16
      %p217 = scmp.lt.s32.totalorder %s216, 31
      %s218 = scalar_select %p217, %s216, 31
      %s219 = smul.addr %s218, 8
      %s220 = scalar_lea.vmem %s0, %s219
      %s221 = smul.u32 8, %s16
      %s222 = smul.u32 8, %s16
      %p223 = scmp.lt.s32.totalorder %s222, 31
      %s224 = scalar_select %p223, %s222, 31
      %s225 = smul.addr %s224, 8
      %s226 = scalar_lea.vmem %s5, %s225
      %s227 = smul.u32 8, %s16
      %v228 = vld [vmem:[%s220] sm:$0xff]
      %v229 = vld [vmem:[%s220 + $0x8] sm:$0xff]
      %v230 = vld [vmem:[%s220 + $0x10] sm:$0xff]
      %v231 = vld [vmem:[%s220 + $0x18] sm:$0xff]
      %v232 = vld [vmem:[%s220 + $0x20] sm:$0xff]
      %v233 = vld [vmem:[%s220 + $0x28] sm:$0xff]
      %v234 = vld [vmem:[%s220 + $0x30] sm:$0xff]
      %v235 = vld [vmem:[%s220 + $0x38] sm:$0xff]
      %v236 = vld [vmem:[%s1] sm:$0xff]
      %v237 = vld [vmem:[%s1 + $0x8] sm:$0xff]
      %v238 = vld [vmem:[%s1 + $0x10] sm:$0xff]
      %v239 = vld [vmem:[%s1 + $0x18] sm:$0xff]
      %v240 = vld [vmem:[%s1 + $0x20] sm:$0xff]
      %v241 = vld [vmem:[%s1 + $0x28] sm:$0xff]
      %v242 = vld [vmem:[%s1 + $0x30] sm:$0xff]
      %v243 = vld [vmem:[%s1 + $0x38] sm:$0xff]
      %v244 = vld [vmem:[%s1 + $0x40] sm:$0xff]
      %v245 = vld [vmem:[%s1 + $0x48] sm:$0xff]
      %v246 = vld [vmem:[%s1 + $0x50] sm:$0xff]
      %v247 = vld [vmem:[%s1 + $0x58] sm:$0xff]
      %v248 = vld [vmem:[%s1 + $0x60] sm:$0xff]
      %v249 = vld [vmem:[%s1 + $0x68] sm:$0xff]
      %v250 = vld [vmem:[%s1 + $0x70] sm:$0xff]
      %v251 = vld [vmem:[%s1 + $0x78] sm:$0xff]
      %v252 = vld [vmem:[%s2] sm:$0x1]
      %v254 = vperm.slane %v252, 0
      %256 = vmatpush.msra.mxu0 %v251
      %257 = vmatpush.msra.mxu0 %v250
      %258 = vmatpush.msra.mxu0 %v249
      %259 = vmatpush.msra.mxu0 %v248
      %260 = vmatpush.msra.mxu0 %v247
      %261 = vmatpush.msra.mxu0 %v246
      %262 = vmatpush.msra.mxu0 %v245
      %263 = vmatpush.msra.mxu0 %v244
      %264 = vmatpush.msra.mxu0 %v243
      %265 = vmatpush.msra.mxu0 %v242
      %266 = vmatpush.msra.mxu0 %v241
      %267 = vmatpush.msra.mxu0 %v240
      %268 = vmatpush.msra.mxu0 %v239
      %269 = vmatpush.msra.mxu0 %v238
      %270 = vmatpush.msra.mxu0 %v237
      %271 = vmatpush.msra.mxu0 %v236
      %272 = vmatmul.f32.gmra.mxu0 %v228
      %v273 = vpop.f32.mrf.mxu0
      %v274 = vadd.f32 %v254, %v273
      %275 = vmatmul.f32.gmra.mxu0 %v229
      %v276 = vpop.f32.mrf.mxu0
      %v277 = vadd.f32 %v254, %v276
      %278 = vmatmul.f32.gmra.mxu0 %v230
      %v279 = vpop.f32.mrf.mxu0
      %v280 = vadd.f32 %v254, %v279
      %281 = vmatmul.f32.gmra.mxu0 %v231
      %v282 = vpop.f32.mrf.mxu0
      %v283 = vadd.f32 %v254, %v282
      %284 = vmatmul.f32.gmra.mxu0 %v232
      %v285 = vpop.f32.mrf.mxu0
      %v286 = vadd.f32 %v254, %v285
      %287 = vmatmul.f32.gmra.mxu0 %v233
      %v288 = vpop.f32.mrf.mxu0
      %v289 = vadd.f32 %v254, %v288
      %290 = vmatmul.f32.gmra.mxu0 %v234
      %v291 = vpop.f32.mrf.mxu0
      %v292 = vadd.f32 %v254, %v291
      %293 = vmatmul.f32.gmra.mxu0 %v235
      %v294 = vpop.f32.mrf.mxu0
      %v295 = vadd.f32 %v254, %v294
      %296 = vdwg.mxu0
      %v297 = vmax.f32 %v274, 0.0
      %v298 = vmax.f32 %v277, 0.0
      %v299 = vmax.f32 %v280, 0.0
      %v300 = vmax.f32 %v283, 0.0
      %v301 = vmax.f32 %v286, 0.0
      %v302 = vmax.f32 %v289, 0.0
      %v303 = vmax.f32 %v292, 0.0
      %v304 = vmax.f32 %v295, 0.0
      %v305 = vld [vmem:[%s3] sm:$0xff]
      %v306 = vld [vmem:[%s3 + $0x8] sm:$0xff]
      %v307 = vld [vmem:[%s3 + $0x10] sm:$0xff]
      %v308 = vld [vmem:[%s3 + $0x18] sm:$0xff]
      %v309 = vld [vmem:[%s3 + $0x20] sm:$0xff]
      %v310 = vld [vmem:[%s3 + $0x28] sm:$0xff]
      %v311 = vld [vmem:[%s3 + $0x30] sm:$0xff]
      %v312 = vld [vmem:[%s3 + $0x38] sm:$0xff]
      %v313 = vld [vmem:[%s3 + $0x40] sm:$0xff]
      %v314 = vld [vmem:[%s3 + $0x48] sm:$0xff]
      %v315 = vld [vmem:[%s3 + $0x50] sm:$0xff]
      %v316 = vld [vmem:[%s3 + $0x58] sm:$0xff]
      %v317 = vld [vmem:[%s3 + $0x60] sm:$0xff]
      %v318 = vld [vmem:[%s3 + $0x68] sm:$0xff]
      %v319 = vld [vmem:[%s3 + $0x70] sm:$0xff]
      %v320 = vld [vmem:[%s3 + $0x78] sm:$0xff]
      %v321 = vld [vmem:[%s4] sm:$0x1]
      %v323 = vperm.slane %v321, 0
      %325 = vmatpush.msra.mxu0 %v320
      %326 = vmatpush.msra.mxu0 %v319
      %327 = vmatpush.msra.mxu0 %v318
      %328 = vmatpush.msra.mxu0 %v317
      %329 = vmatpush.msra.mxu0 %v316
      %330 = vmatpush.msra.mxu0 %v315
      %331 = vmatpush.msra.mxu0 %v314
      %332 = vmatpush.msra.mxu0 %v313
      %333 = vmatpush.msra.mxu0 %v312
      %334 = vmatpush.msra.mxu0 %v311
      %335 = vmatpush.msra.mxu0 %v310
      %336 = vmatpush.msra.mxu0 %v309
      %337 = vmatpush.msra.mxu0 %v308
      %338 = vmatpush.msra.mxu0 %v307
      %339 = vmatpush.msra.mxu0 %v306
      %340 = vmatpush.msra.mxu0 %v305
      %341 = vmatmul.f32.gmra.mxu0 %v297
      %v342 = vpop.f32.mrf.mxu0
      %v343 = vadd.f32 %v323, %v342
      %344 = vmatmul.f32.gmra.mxu0 %v298
      %v345 = vpop.f32.mrf.mxu0
      %v346 = vadd.f32 %v323, %v345
      %347 = vmatmul.f32.gmra.mxu0 %v299
      %v348 = vpop.f32.mrf.mxu0
      %v349 = vadd.f32 %v323, %v348
      %350 = vmatmul.f32.gmra.mxu0 %v300
      %v351 = vpop.f32.mrf.mxu0
      %v352 = vadd.f32 %v323, %v351
      %353 = vmatmul.f32.gmra.mxu0 %v301
      %v354 = vpop.f32.mrf.mxu0
      %v355 = vadd.f32 %v323, %v354
      %356 = vmatmul.f32.gmra.mxu0 %v302
      %v357 = vpop.f32.mrf.mxu0
      %v358 = vadd.f32 %v323, %v357
      %359 = vmatmul.f32.gmra.mxu0 %v303
      %v360 = vpop.f32.mrf.mxu0
      %v361 = vadd.f32 %v323, %v360
      %362 = vmatmul.f32.gmra.mxu0 %v304
      %v363 = vpop.f32.mrf.mxu0
      %v364 = vadd.f32 %v323, %v363
      %365 = vdwg.mxu0
      %366 = vst [vmem:[%s226] sm:$0xff] %v343
      %367 = vst [vmem:[%s226 + $0x8] sm:$0xff] %v346
      %368 = vst [vmem:[%s226 + $0x10] sm:$0xff] %v349
      %369 = vst [vmem:[%s226 + $0x18] sm:$0xff] %v352
      %370 = vst [vmem:[%s226 + $0x20] sm:$0xff] %v355
      %371 = vst [vmem:[%s226 + $0x28] sm:$0xff] %v358
      %372 = vst [vmem:[%s226 + $0x30] sm:$0xff] %v361
      %373 = vst [vmem:[%s226 + $0x38] sm:$0xff] %v364
      %s374 = smul.u32 8, %s16
      %p375 = scmp.lt.s32.totalorder %s374, 31
      %s376 = scalar_select %p375, %s374, 31
      %s377 = smul.addr %s376, 8
      %s378 = scalar_lea.vmem %s5, %s377
      // Predicated region
      $region41: #{edge_model_packed.1} parent=39 // pred_check
        %p379 = pneg %p144
      $region42: #{edge_model_packed.1} parent=39 // pred_check_branch
        %381 = sbr.rel (%p379) target = $region44
      $region43: #{edge_model_packed.1} parent=39 // pred_region
        %s382 = smul.u32 8, %s16
      $region44: #{edge_model_packed.1} parent=39 // pred_fallthru
        _
    $region40: #{edge_model_packed.1} parent=5 // pred_fallthru
      _
    %p383 = scmp.le.s32.totalorder 2, %s11
    // Predicated region
    $region45: #{edge_model_packed.1} parent=5 // pred_check
      %p384 = pneg %p383
    $region46: #{edge_model_packed.1} parent=5 // pred_check_branch
      %386 = sbr.rel (%p384) target = $region48
    $region47: #{edge_model_packed.1} parent=5 // pred_region
      %s387 = ssub.s32 %s11, 2
      // Predicated region
      $region49: #{edge_model_packed.1} parent=47 // pred_check
        %p388 = pneg %p150
      $region50: #{edge_model_packed.1} parent=47 // pred_check_branch
        %390 = sbr.rel (%p388) target = $region52
      $region51: #{edge_model_packed.1} parent=47 // pred_region
        %s391 = smul.u32 8, %s17
        %p392 = scmp.lt.s32.totalorder %s391, 31
        %s393 = scalar_select %p392, %s391, 31
        %s394 = smul.addr %s393, 8
        %s395 = scalar_lea.vmem %s5, %s394
      $region52: #{edge_model_packed.1} parent=47 // pred_fallthru
        _
    $region48: #{edge_model_packed.1} parent=5 // pred_fallthru
      _
  $region6: #{edge_model_packed.1} parent=0 // loop_footer
    %s15 = sadd.s32 1, %s11
  $region7: #{edge_model_packed.1} parent=0 // loop_footer_branch
    %10 = sbr.rel target = $region3
  $region8: #{edge_model_packed.1} parent=0 // loop_exit
    _

</llo_original>
